<compile_context>
chip_gen: v5e
topology: v5e:2x2
jax: 0.10.0
libtpu: 0.0.40
codegen_flags: <defaults>
</compile_context>

<pallas_src>
from functools import partial

import jax
import jax.numpy as jnp
import numpy as np
from jax.experimental import pallas as pl
from jax.experimental.pallas import tpu as pltpu


def _round_up(x, m):
    return (x + m - 1) // m * m


def starnet_head_kernel(x_ref, w_ref, b_ref, o_ref, *, eps, out_features,
                        mxu_dtype, apply_softplus, apply_logsoftmax):
    """One grid step == one block of rows.

    x_ref: (TM, F)   activations (feature dim on lanes), caller dtype
    w_ref: (F, Op)   LN-affine-folded Linear weight, lane-padded for the MXU
    b_ref: (1, O)    LN-affine-folded Linear bias (unpadded)
    o_ref: (TM, O)   output at its true width (masked store, never saturates)
    """
    x = x_ref[...].astype(jnp.float32)                       # (TM, F)

    # --- LayerNorm statistics: two-pass (centered) variance, f32 ---
    inv_n = 1.0 / x.shape[-1]
    mean = jnp.sum(x, axis=-1, keepdims=True) * inv_n
    xc = x - mean
    var = jnp.maximum(jnp.sum(xc * xc, axis=-1, keepdims=True) * inv_n, 0.0)
    xn = xc * jax.lax.rsqrt(var + eps)                        # affine folded into W

    # --- Linear: whole row block in one MXU matmul ---
    o = jnp.dot(xn.astype(mxu_dtype), w_ref[...],
                preferred_element_type=jnp.float32)           # (TM, Op)
    o = o[:, :out_features] + b_ref[0, :]                     # drop MXU lane padding

    # --- Fused optional epilogue (EUP/VPU are idle in this mem-bound kernel) ---
    if apply_softplus:
        o = jnp.maximum(o, 0.0) + jnp.log(1.0 + jnp.exp(-jnp.abs(o)))
    if apply_logsoftmax:
        m = jnp.max(o, axis=-1, keepdims=True)
        o = o - m
        o = o - jnp.log(jnp.sum(jnp.exp(o), axis=-1, keepdims=True))

    o_ref[...] = o.astype(o_ref.dtype)


def _pick_tm(M, F, O, Op, xbytes, wbytes, block_rows):
    """Row tile: multiple of 8; >=2 grid steps when M allows (v7x has 2 TCs);
    capped so the VMEM footprint stays safe on every generation."""
    if M >= 16:
        tm = min(block_rows, _round_up(pl.cdiv(M, 2), 8))
    else:
        tm = _round_up(max(M, 1), 8)
    tm = max(tm, 8)

    def need(t):  # double-buffered x/out + weight + f32 intermediates
        return (2 * t * F * xbytes + 2 * t * O * xbytes
                + 2 * F * Op * wbytes + 4 * t * (2 * F + Op))

    budget = 24 * 1024 * 1024
    while tm > 8 and need(tm) > budget:
        tm = max(8, _round_up(tm // 2, 8))
    return tm


def starnet_head(x, params, *, eps=1e-5, softplus=False, logsoftmax=False,
                 block_rows=512, use_pallas=None):
    """x: (..., in_features).
    params = (ln_w, ln_b, w, b); ln_w/ln_b: (F,), w: (F, O) (transposed PyTorch
    Linear weight), b: (O,)."""
    ln_w, ln_b, w, b = params
    F = x.shape[-1]
    O = w.shape[1]
    assert ln_w.shape == (F,) and ln_b.shape == (F,)
    assert w.shape == (F, O) and b.shape == (O,)

    lead = x.shape[:-1]
    M = int(np.prod(lead)) if lead else 1

    # Small-problem fallback: the fixed pallas_call/DMA setup cost dwarfs the
    # work below this size; plain XLA fusion is faster.
    if use_pallas is None:
        use_pallas = M * F >= 64 * 1024
    if not use_pallas:
        return reference_head(x, params, eps=eps, softplus=softplus,
                              logsoftmax=logsoftmax)

    x2 = x.reshape(M, F)                                # keep caller dtype, no pad
    mxu_dtype = jnp.bfloat16 if x2.dtype == jnp.bfloat16 else jnp.float32
    xbytes = jnp.dtype(x2.dtype).itemsize
    wbytes = jnp.dtype(mxu_dtype).itemsize

    # Fold the LayerNorm affine into the Linear (exact):
    #   LN(x)@W + b = ((x-mean)*rstd) @ (ln_w[:,None]*W) + (ln_b@W + b)
    w32 = w.astype(jnp.float32)
    w_fold = ln_w.astype(jnp.float32)[:, None] * w32
    b_fold = (b.astype(jnp.float32) + ln_b.astype(jnp.float32) @ w32).reshape(1, O)

    # Lane-pad only the MXU weight operand; HBM output stays at width O.
    Op = _round_up(max(O, 128), 128)
    w_p = jnp.pad(w_fold, ((0, 0), (0, Op - O))).astype(mxu_dtype)

    TM = _pick_tm(M, F, O, Op, xbytes, wbytes, block_rows)
    grid = (pl.cdiv(M, TM),)

    # LogSoftmax(dim=1) only equals the feature axis for 2-D inputs -> fuse then.
    fuse_lsm = bool(logsoftmax) and x.ndim == 2

    kernel = partial(starnet_head_kernel, eps=eps, out_features=O,
                     mxu_dtype=mxu_dtype, apply_softplus=bool(softplus),
                     apply_logsoftmax=fuse_lsm)

    vmem_need = (2 * TM * F * xbytes + 2 * TM * O * xbytes
                 + 2 * F * Op * wbytes + 2 * O * 4 + 4 * TM * (2 * F + Op))
    vmem_limit = int(min(max(2 * vmem_need, 16 * 1024 * 1024), 48 * 1024 * 1024))

    cost = pl.CostEstimate(
        flops=2 * M * F * Op + 8 * M * F
              + (4 * M * O if (softplus or fuse_lsm) else 0),
        transcendentals=M + (2 * M * O if softplus else 0) + (M * O if fuse_lsm else 0),
        bytes_accessed=xbytes * M * F + wbytes * F * Op + 4 * O + xbytes * M * O,
    )

    out = pl.pallas_call(
        kernel,
        out_shape=jax.ShapeDtypeStruct((M, O), x2.dtype),
        grid_spec=pltpu.PrefetchScalarGridSpec(
            num_scalar_prefetch=0,
            grid=grid,
            in_specs=[
                pl.BlockSpec((TM, F), lambda i: (i, 0)),    # activations
                pl.BlockSpec((F, Op), lambda i: (0, 0)),    # folded weight (resident)
                pl.BlockSpec((1, O), lambda i: (0, 0)),     # folded bias
            ],
            out_specs=pl.BlockSpec((TM, O), lambda i: (i, 0)),
        ),
        compiler_params=pltpu.CompilerParams(
            dimension_semantics=("parallel",),
            vmem_limit_bytes=vmem_limit),
        cost_estimate=cost,
    )(x2, w_p, b_fold)

    out = out.reshape(*lead, O)

    if logsoftmax and not fuse_lsm:
        # TODO(synk): PyTorch applies LogSoftmax(dim=1) regardless of rank; for
        # >2-D inputs dim=1 is a leading dim, so it cannot be fused row-wise.
        out = jax.nn.log_softmax(out, axis=1)
    return out


def reference_head(x, params, *, eps=1e-5, softplus=False, logsoftmax=False):
    """Pure-JAX reference mirroring the PyTorch module."""
    ln_w, ln_b, w, b = params
    xf = x.astype(jnp.float32)
    mean = jnp.mean(xf, axis=-1, keepdims=True)
    var = jnp.mean((xf - mean) ** 2, axis=-1, keepdims=True)
    xn = (xf - mean) / jnp.sqrt(var + eps) * ln_w + ln_b
    out = xn @ w.astype(jnp.float32) + b.astype(jnp.float32)
    if softplus:
        out = jax.nn.softplus(out)
    if logsoftmax:
        out = jax.nn.log_softmax(out, axis=1)
    return out.astype(x.dtype)


def make_params(key, in_features, out_features=6):
    k1, k2, k3, k4 = jax.random.split(key, 4)
    ln_w = 1.0 + 0.1 * jax.random.normal(k1, (in_features,), jnp.float32)
    ln_b = 0.1 * jax.random.normal(k2, (in_features,), jnp.float32)
    bound = 1.0 / np.sqrt(in_features)
    w = jax.random.uniform(k3, (in_features, out_features), jnp.float32,
                           -bound, bound)
    b = jax.random.uniform(k4, (out_features,), jnp.float32, -bound, bound)
    return (ln_w, ln_b, w, b)


if __name__ == "__main__":
    F, O = 32, 6
    key = jax.random.PRNGKey(0)
    kx1, kx2, kp = jax.random.split(key, 3)
    params = make_params(kp, in_features=F, out_features=O)

    # Case 1: 2-D input (batch=8, hidden=32), plain head.
    x1 = jax.random.normal(kx1, (8, F), jnp.float32)
    out1 = jax.block_until_ready(starnet_head(x1, params, use_pallas=True))
    ref1 = reference_head(x1, params)
    assert out1.shape == (8, O)
    assert np.allclose(np.asarray(out1), np.asarray(ref1), rtol=1e-4, atol=1e-4)

    # Case 2: 3-D input (2, 20, 32) -> 40 rows, 2 grid steps w/ a partial block,
    # fused softplus epilogue.
    x2 = jax.random.normal(kx2, (2, 20, F), jnp.float32)
    out2 = jax.block_until_ready(
        starnet_head(x2, params, softplus=True, use_pallas=True))
    ref2 = reference_head(x2, params, softplus=True)
    assert out2.shape == (2, 20, O)
    assert np.allclose(np.asarray(out2), np.asarray(ref2), rtol=1e-4, atol=1e-4)

    # Case 3: fused log-softmax on a 2-D input (dim=1 == feature axis).
    out3 = jax.block_until_ready(
        starnet_head(x1, params, logsoftmax=True, use_pallas=True))
    ref3 = reference_head(x1, params, logsoftmax=True)
    assert np.allclose(np.asarray(out3), np.asarray(ref3), rtol=1e-4, atol=1e-4)

    print("KERNEL_OK")
</pallas_src>

<mosaic_0001>
module attributes {stable_mosaic.version = 11 : i64} {
  func.func @starnet_head_kernel(%arg0: i32, %arg1: memref<8x32xf32, #tpu.memory_space<vmem>>, %arg2: memref<32x128xf32, #tpu.memory_space<vmem>>, %arg3: memref<1x6xf32, #tpu.memory_space<vmem>>, %arg4: memref<8x6xf32, #tpu.memory_space<vmem>>) attributes {dimension_semantics = [#tpu.dimension_semantics<parallel>], iteration_bounds = array<i64: 1>, scalar_prefetch = 0 : i64, scratch_operands = 0 : i64, tpu.core_type = #tpu.core_type<tc>, window_params = [{transform_indices = @transform_0, window_bounds = array<i64: 8, 32>}, {pipeline_mode = #tpu.pipeline_mode<synchronous>, transform_indices = @transform_1, window_bounds = array<i64: 32, 128>}, {pipeline_mode = #tpu.pipeline_mode<synchronous>, transform_indices = @transform_2, window_bounds = array<i64: 1, 6>}, {transform_indices = @transform_3, window_bounds = array<i64: 8, 6>}]} {
    %c0 = arith.constant 0 : index
    %c0_0 = arith.constant 0 : index
    %0 = vector.load %arg1[%c0, %c0_0] : memref<8x32xf32, #tpu.memory_space<vmem>>, vector<8x32xf32>
    %cst = arith.constant dense<0.000000e+00> : vector<8xf32>
    %1 = vector.multi_reduction <add>, %0, %cst [1] : vector<8x32xf32> to vector<8xf32>
    %2 = vector.shape_cast %1 : vector<8xf32> to vector<8x1xf32>
    %cst_1 = arith.constant 3.125000e-02 : f32
    %3 = vector.broadcast %cst_1 : f32 to vector<8x1xf32>
    %4 = arith.mulf %2, %3 : vector<8x1xf32>
    %5 = vector.broadcast %4 : vector<8x1xf32> to vector<8x32xf32>
    %6 = arith.subf %0, %5 : vector<8x32xf32>
    %7 = arith.mulf %6, %6 : vector<8x32xf32>
    %cst_2 = arith.constant dense<0.000000e+00> : vector<8xf32>
    %8 = vector.multi_reduction <add>, %7, %cst_2 [1] : vector<8x32xf32> to vector<8xf32>
    %9 = vector.shape_cast %8 : vector<8xf32> to vector<8x1xf32>
    %cst_3 = arith.constant 3.125000e-02 : f32
    %10 = vector.broadcast %cst_3 : f32 to vector<8x1xf32>
    %11 = arith.mulf %9, %10 : vector<8x1xf32>
    %cst_4 = arith.constant 0.000000e+00 : f32
    %12 = vector.broadcast %cst_4 : f32 to vector<8x1xf32>
    %13 = arith.maximumf %11, %12 : vector<8x1xf32>
    %cst_5 = arith.constant 9.99999974E-6 : f32
    %14 = vector.broadcast %cst_5 : f32 to vector<8x1xf32>
    %15 = arith.addf %13, %14 : vector<8x1xf32>
    %16 = math.rsqrt %15 : vector<8x1xf32>
    %17 = vector.broadcast %16 : vector<8x1xf32> to vector<8x32xf32>
    %18 = arith.mulf %6, %17 : vector<8x32xf32>
    %c0_6 = arith.constant 0 : index
    %c0_7 = arith.constant 0 : index
    %19 = vector.load %arg2[%c0_6, %c0_7] : memref<32x128xf32, #tpu.memory_space<vmem>>, vector<32x128xf32>
    %cst_8 = arith.constant dense<0.000000e+00> : vector<8x128xf32>
    %20 = tpu.matmul %18, %19, %cst_8 {dimension_numbers = #tpu.dot_dimension_numbers<[1], [0], [0], [1], [0, 0, 1, 1], [], []>} : vector<8x32xf32>, vector<32x128xf32>, vector<8x128xf32> -> vector<8x128xf32>
    %21 = vector.extract_strided_slice %20 {offsets = [0, 0], sizes = [8, 6], strides = [1, 1]} : vector<8x128xf32> to vector<8x6xf32>
    %c0_9 = arith.constant 0 : index
    %c0_10 = arith.constant 0 : index
    %22 = vector.load %arg3[%c0_9, %c0_10] : memref<1x6xf32, #tpu.memory_space<vmem>>, vector<1x6xf32>
    %23 = vector.shape_cast %22 : vector<1x6xf32> to vector<6xf32>
    %24 = vector.shape_cast %23 : vector<6xf32> to vector<1x6xf32>
    %25 = vector.broadcast %24 : vector<1x6xf32> to vector<8x6xf32>
    %26 = arith.addf %21, %25 : vector<8x6xf32>
    %c0_11 = arith.constant 0 : index
    %c0_12 = arith.constant 0 : index
    %27 = vector.load %arg4[%c0_11, %c0_12] : memref<8x6xf32, #tpu.memory_space<vmem>>, vector<8x6xf32>
    tpu.vector_store %arg4[%c0_11, %c0_12], %26 {strides = array<i32>} : memref<8x6xf32, #tpu.memory_space<vmem>>, vector<8x6xf32>,
    return
  }
  func.func @transform_0(%arg0: i32) -> (i32, i32) {
    %c0_i32 = arith.constant 0 : i32
    %c0_i32_0 = arith.constant 0 : i32
    return %arg0, %c0_i32 : i32, i32
  }
  func.func @transform_1(%arg0: i32) -> (i32, i32) {
    %c0_i32 = arith.constant 0 : i32
    %c0_i32_0 = arith.constant 0 : i32
    %c0_i32_1 = arith.constant 0 : i32
    return %c0_i32, %c0_i32_0 : i32, i32
  }
  func.func @transform_2(%arg0: i32) -> (i32, i32) {
    %c0_i32 = arith.constant 0 : i32
    %c0_i32_0 = arith.constant 0 : i32
    %c0_i32_1 = arith.constant 0 : i32
    return %c0_i32, %c0_i32_0 : i32, i32
  }
  func.func @transform_3(%arg0: i32) -> (i32, i32) {
    %c0_i32 = arith.constant 0 : i32
    %c0_i32_0 = arith.constant 0 : i32
    return %arg0, %c0_i32 : i32, i32
  }
}

</mosaic_0001>

<llo_original>
// kernel: tpu_custom_call.1
$region0: #{tpu_custom_call.1}
  #allocation0 [shape = 'u32[]', space=smem, size = 0x4, offset = 0x4, fixed_abs, tag = 'smem constant byte address 0x4 - core index']
  #allocation1 [shape = 'u32[72,128]{1,0:T(1,128)}', space=vmem, size = 0x9000, scoped, tag = 'internal scratch']
  %s0 = inlined_call_operand.hbm [shape: f32[8,32], index: 0, kind: input, shape index: {}]
  %s1 = inlined_call_operand.hbm [shape: f32[32,128], index: 1, kind: input, shape index: {}]
  %s2 = inlined_call_operand.vmem [shape: f32[1,6], index: 2, kind: input, shape index: {}]
  %s3 = inlined_call_operand.hbm [shape: f32[8,6], index: 3, kind: output, shape index: {}]
  %s4 = sld [smem:[#allocation0]]
  $region30: #{tpu_custom_call.1} parent=0
    _
  %s6 = ssub.s32 1, %s4
  %s7 = scalar_select 0, %s6, %s4
  $region1: #{tpu_custom_call.1} parent=0
    #allocation2 [shape = 'u8[4096]{0}', space=vmem, size = 0x1000, scoped, tag = 'input window, operand 0, single buffered']
    #allocation3 [shape = 's32[1]{0}', space=sflag, size = 0x4, scoped, tag = 'scoped memory for tpu_custom_call.1']
    #allocation4 [shape = 's32[1]{0}', space=sflag, size = 0x4, scoped, tag = 'scoped memory for tpu_custom_call.1']
    #allocation5 [shape = 'u8[16384]{0}', space=vmem, size = 0x4000, scoped, tag = 'input window, operand 1, single buffered']
    #allocation6 [shape = 's32[1]{0}', space=sflag, size = 0x4, scoped, tag = 'scoped memory for tpu_custom_call.1']
    #allocation7 [shape = 'u8[4096]{0}', space=vmem, size = 0x1000, scoped, tag = 'output window, operand 0, single buffered']
    %8 = vsyncpa [#allocation3], 0
    %9 = vsyncpa [#allocation6], 0
    %10 = vsyncpa [#allocation4], 0
    // Predicated region
    $region2: #{tpu_custom_call.1} parent=1 // pred_check
      _
    $region3: #{tpu_custom_call.1} parent=1 // pred_check_branch
      %12 = sbr.rel (0) target = $region5
    $region4: #{tpu_custom_call.1} parent=1 // pred_region
      %14 = vsyncadd [#allocation3], 0
      %s16 = sshll.u32 %s0, 4
      %s17 = int_to_ptr.hbm [resolvable:$true] %s16
      %s18 = sshll.u32 [#allocation2], 4
      %s19 = int_to_ptr.vmem [resolvable:$true] %s18
      %21 = dma.hbm_to_vmem [thread:$0]  %s17, 128, %s19, [#allocation3]
    $region5: #{tpu_custom_call.1} parent=1 // pred_fallthru
      _
    // Predicated region
    $region6: #{tpu_custom_call.1} parent=1 // pred_check
      _
    $region7: #{tpu_custom_call.1} parent=1 // pred_check_branch
      %23 = sbr.rel (0) target = $region9
    $region8: #{tpu_custom_call.1} parent=1 // pred_region
      %25 = vsyncadd [#allocation6], 0
      %s26 = sshll.u32 %s1, 4
      %s27 = int_to_ptr.hbm [resolvable:$true] %s26
      %s28 = sshll.u32 [#allocation5], 4
      %s29 = int_to_ptr.vmem [resolvable:$true] %s28
      %34 = dma.hbm_to_vmem [thread:$0]  %s27, 512, %s29, [#allocation6], 128, 128, 8
    $region9: #{tpu_custom_call.1} parent=1 // pred_fallthru
      _
    // Predicated region
    $region10: #{tpu_custom_call.1} parent=1 // pred_check
      _
    $region11: #{tpu_custom_call.1} parent=1 // pred_check_branch
      %36 = sbr.rel (0) target = $region13
    $region12: #{tpu_custom_call.1} parent=1 // pred_region
      _
    $region13: #{tpu_custom_call.1} parent=1 // pred_fallthru
      _
    // Predicated region
    $region14: #{tpu_custom_call.1} parent=1 // pred_check
      _
    $region15: #{tpu_custom_call.1} parent=1 // pred_check_branch
      %38 = sbr.rel (0) target = $region17
    $region16: #{tpu_custom_call.1} parent=1 // pred_region
      %40 = dma.done [#allocation3], 128
    $region17: #{tpu_custom_call.1} parent=1 // pred_fallthru
      _
    // Predicated region
    $region18: #{tpu_custom_call.1} parent=1 // pred_check
      _
    $region19: #{tpu_custom_call.1} parent=1 // pred_check_branch
      %42 = sbr.rel (0) target = $region21
    $region20: #{tpu_custom_call.1} parent=1 // pred_region
      %44 = dma.done [#allocation6], 512
    $region21: #{tpu_custom_call.1} parent=1 // pred_fallthru
      _
    %v45 = vld [vmem:[#allocation2] sm:$0xff]
    %vm46 = vcmask 261120
    %v47 = vsel %vm46, %v45, 0.0
    %48 = vadd.xlane.f32.xlu0 %v47
    %v49 = vpop.xlane.xlu0 %48
    %v50 = vmul.f32 %v49, 0.03125
    %v51 = vsub.f32 %v45, %v50
    %v52 = vmul.f32 %v51, %v51
    %v53 = vsel %vm46, %v52, 0.0
    %54 = vadd.xlane.f32.xlu0 %v53
    %v55 = vpop.xlane.xlu0 %54
    %v56 = vmul.f32 %v55, 0.03125
    %v57 = vmax.f32 %v56, 0.0
    %v58 = vadd.f32 %v57, 1e-05
    %v59 = vrsqrt.pop %v58
    %v60 = vmul.f32 %v59, %v58
    %v61 = vmul.f32 %v60, %v59
    %v62 = vmul.f32 0.5, %v61
    %v63 = vsub.f32 1.5, %v62
    %v64 = vmul.f32 %v59, %v63
    %vm65 = vweird.f32 %v58
    %vm66 = vweird.f32 %v59
    %vm67 = vmor %vm65, %vm66
    %v68 = vsel %vm67, %v59, %v64
    %v69 = vmul.f32 %v51, %v68
    %v70 = vld [vmem:[#allocation5] sm:$0xff]
    %v71 = vld [vmem:[#allocation5 + $0x8] sm:$0xff]
    %v72 = vld [vmem:[#allocation5 + $0x10] sm:$0xff]
    %v73 = vld [vmem:[#allocation5 + $0x18] sm:$0xff]
    %v75 = vsel %vm46, %v69, 0
    %77 = vmatpush.msra.mxu0 0.0
    %78 = vmatpush.msra.mxu0 0.0
    %79 = vmatpush.msra.mxu0 0.0
    %80 = vmatpush.msra.mxu0 0.0
    %81 = vmatpush.msra.mxu0 0.0
    %82 = vmatpush.msra.mxu0 0.0
    %83 = vmatpush.msra.mxu0 0.0
    %84 = vmatpush.msra.mxu0 0.0
    %85 = vmatpush.msra.mxu0 0.0
    %86 = vmatpush.msra.mxu0 0.0
    %87 = vmatpush.msra.mxu0 0.0
    %88 = vmatpush.msra.mxu0 0.0
    %89 = vmatpush.msra.mxu0 %v73
    %90 = vmatpush.msra.mxu0 %v72
    %91 = vmatpush.msra.mxu0 %v71
    %92 = vmatpush.msra.mxu0 %v70
    %93 = vmatmul.f32.gmra.mxu0 %v75
    %v94 = vpop.f32.mrf.mxu0
    %v95 = vadd.f32 0.0, %v94
    %96 = vdwg.mxu0
    %v97 = vld [vmem:[%s2] sm:$0x1]
    %v99 = vperm.slane %v97, 0
    %v101 = vadd.f32 %v95, %v99
    %vm102 = vcmask 48128
    %103 = vst.msk [vmem:[#allocation7] sm:$0xff] %vm102, %v101
    // Predicated region
    $region22: #{tpu_custom_call.1} parent=1 // pred_check
      _
    $region23: #{tpu_custom_call.1} parent=1 // pred_check_branch
      %105 = sbr.rel (0) target = $region25
    $region24: #{tpu_custom_call.1} parent=1 // pred_region
      %107 = vsyncadd [#allocation4], 0
      %s109 = sshll.u32 [#allocation7], 4
      %s110 = int_to_ptr.vmem [resolvable:$true] %s109
      %s111 = sshll.u32 %s3, 4
      %s112 = int_to_ptr.hbm [resolvable:$true] %s111
      %114 = dma.vmem_to_hbm [thread:$0]  %s110, 128, %s112, [#allocation4]
    $region25: #{tpu_custom_call.1} parent=1 // pred_fallthru
      _
    // Predicated region
    $region26: #{tpu_custom_call.1} parent=1 // pred_check
      _
    $region27: #{tpu_custom_call.1} parent=1 // pred_check_branch
      %116 = sbr.rel (0) target = $region29
    $region28: #{tpu_custom_call.1} parent=1 // pred_region
      %118 = dma.done [#allocation4], 128
    $region29: #{tpu_custom_call.1} parent=1 // pred_fallthru
      _
    %119 = vsyncpa [#allocation3], 1
    %120 = vsyncpa [#allocation6], 1
    %121 = vsyncpa [#allocation4], 1

</llo_original>
